<compile_context>
chip_gen: v7x
topology: tpu7x:2x2x1
jax: 0.10.0
libtpu: 0.0.40
codegen_flags: <defaults>
</compile_context>

<pallas_src>
import functools

import jax
import jax.numpy as jnp
from jax import lax
from jax.experimental import pallas as pl
from jax.experimental.pallas import tpu as pltpu


_EPS = 1e-6


@functools.lru_cache(maxsize=1)
def _vmem_budgets():
    """(vmem_limit_bytes, block_budget_bytes) sized to the local TPU generation."""
    try:
        cap = pltpu.get_tpu_info().vmem_capacity_bytes
    except Exception:  # not on TPU / API unavailable -> assume smallest (v7x, 64 MiB/TC)
        cap = 64 * 1024 * 1024
    if cap >= 100 * 1024 * 1024:
        # v5e / v6e: 128 MiB per TensorCore -> use most of it for 1-read slabs.
        return 100 * 1024 * 1024, 84 * 1024 * 1024
    # v7x: 64 MiB per TensorCore -> leave headroom for Mosaic internal scratch.
    return 48 * 1024 * 1024, 36 * 1024 * 1024


def _sublane_granularity(itemsize):
    # 8 rows per f32 vreg; sub-32-bit dtypes pack 2x/4x rows per sublane.
    return 8 * max(1, 4 // itemsize)


def _pick_row_chunk(hw, cp, itemsize):
    """Rows of the resident slab reduced per fori_loop step (bounds f32 temps)."""
    gran = _sublane_granularity(itemsize)
    target = 2 * 1024 * 1024  # ~2 MiB of f32 temp per reduction step
    if hw * cp * 4 <= target:
        return hw
    best = None
    t = gran
    while t <= hw:
        if hw % t == 0 and t * cp * 4 <= target:
            best = t
        t += gran
    return best if best is not None else hw


def _single_pass_cost(bn, hw, cp, itemsize, row_chunk):
    slab = bn * hw * cp * itemsize
    # f32 cast + square + partial-sum temporaries for one reduction chunk only
    # (no full-slab f32 copy thanks to the chunked fori_loop reduction).
    red_tmp = 3 * bn * min(row_chunk, hw) * cp * 4
    return 4 * slab + red_tmp  # 2x input + 2x output double buffers + temps


def _pick_bn(n, hw, cp, itemsize, row_chunk, budget):
    """Batch elements folded into one single-pass block (None if Bn=1 won't fit)."""
    divisors = [d for d in range(1, n + 1) if n % d == 0]
    fitting = [d for d in divisors
               if _single_pass_cost(d, hw, cp, itemsize, row_chunk) <= budget]
    if not fitting:
        return None
    slab1 = hw * cp * itemsize
    # Amortize per-grid-step overhead (~0.35us) and tiny DMAs on late 7x7
    # stages, but don't grow blocks past ~1 MiB of payload per buffer.
    big_enough = [d for d in fitting if d * slab1 >= (1 << 20)]
    return min(big_enough) if big_enough else max(fitting)


def _pick_hw_tile(hw, cp, itemsize, budget):
    gran = _sublane_granularity(itemsize)

    def cost(t):
        # 2x in + 2x out double buffers + f32 cast/square temps for phase 0.
        return 4 * t * cp * itemsize + 2 * t * cp * 4

    valid = [t for t in range(1, hw + 1)
             if hw % t == 0 and (t == hw or t % gran == 0)]
    fitting = [t for t in valid if cost(t) <= budget]
    if not fitting:
        # TODO(synk): tile the channel axis too for enormous C; fail loudly
        # instead of silently exceeding the VMEM budget.
        raise ValueError(
            f"GRN two-phase path: no HW tile of {hw} rows (granularity {gran}) "
            f"fits the {budget}-byte VMEM budget for C={cp}.")
    # ~1-2 MiB tiles already hit ~85%+ of HBM roofline; bigger tiles waste VMEM
    # (critical on v7x) and lengthen exposed prologue DMAs at phase boundaries.
    target = 2 * 1024 * 1024
    capped = [t for t in fitting if t * cp * itemsize <= target]
    return max(capped) if capped else min(fitting)


def _grn_single_pass_kernel(x_ref, gamma_ref, beta_ref, o_ref, *, row_chunk, c_inv):
    """One (Bn, HW, Cp) slab per grid step; x is read from HBM exactly once."""
    bn, hw, cp = x_ref.shape
    n_chunks = hw // row_chunk  # static; wrapper guarantees divisibility

    # Per-channel sum of squares over HW, accumulated in f32.  Chunked so the
    # f32 cast/square temporaries never materialize a full-slab f32 copy.
    # (If VALU ever saturates on v5e f32 inputs, the MXU route
    #  ones(1, HW) @ (x*x) is the cheap escape hatch.)
    if n_chunks <= 1:
        xf = x_ref[...].astype(jnp.float32)
        ssq = jnp.sum(xf * xf, axis=1)                                # (Bn, Cp)
    else:
        def body(i, acc):
            start = pl.multiple_of(i * row_chunk, 8)
            xc = x_ref[:, pl.ds(start, row_chunk), :].astype(jnp.float32)
            return acc + jnp.sum(xc * xc, axis=1)
        ssq = lax.fori_loop(0, n_chunks, body,
                            jnp.zeros((bn, cp), jnp.float32),
                            unroll=n_chunks <= 8)

    gx = jnp.sqrt(ssq)                                                # (Bn, Cp)
    # Padded channels carry gx == 0, so sum / real_C is the true channel mean.
    mean = jnp.sum(gx, axis=-1, keepdims=True) * c_inv                # (Bn, 1)
    nx = gx / (mean + _EPS)
    # Fused epilogue: gamma*(x*nx) + beta + x == x*(gamma*nx + 1) + beta.
    scale = gamma_ref[...].astype(jnp.float32) * nx + 1.0             # (Bn, Cp)
    x = x_ref[...]
    o_ref[...] = (x * scale[:, None, :].astype(x.dtype)
                  + beta_ref[...].astype(x.dtype)[None])


def _grn_two_phase_kernel(x_ref, gamma_ref, beta_ref, o_ref, ssq_ref, scale_ref,
                          *, c_inv):
    """grid = (N, 2, HW_tiles). Phase 0: per-channel sum-of-squares; phase 1: apply."""
    phase = pl.program_id(1)
    hw = pl.program_id(2)

    @pl.when(phase == 0)
    def _():
        @pl.when(hw == 0)
        def _():
            ssq_ref[...] = jnp.zeros_like(ssq_ref)
        xf = x_ref[...].astype(jnp.float32)                           # (T, Cp)
        ssq_ref[...] += jnp.sum(xf * xf, axis=0, keepdims=True)

    @pl.when(phase == 1)
    def _():
        @pl.when(hw == 0)
        def _():
            gx = jnp.sqrt(ssq_ref[...])                               # (1, Cp)
            mean = jnp.sum(gx, axis=-1, keepdims=True) * c_inv
            nx = gx / (mean + _EPS)
            scale_ref[...] = gamma_ref[...].astype(jnp.float32) * nx + 1.0
        x = x_ref[...]                                                # (T, Cp)
        o_ref[...] = (x * scale_ref[...].astype(x.dtype)
                      + beta_ref[...].astype(x.dtype))


@functools.partial(jax.jit, static_argnames=("force_two_phase", "hw_tile"))
def grn_pallas(x, gamma, beta, *, force_two_phase=False, hw_tile=None):
    N, H, W, C = x.shape
    HW = H * W
    itemsize = jnp.dtype(x.dtype).itemsize
    vmem_limit, budget = _vmem_budgets()

    # Pad C to a lane-dense multiple of 128 so every output store is an
    # unmasked full-lane vst.  Padded channels are mathematically inert
    # (x = 0, gamma = 0, beta = 0) and the mean divides by the real C.
    Cp = ((C + 127) // 128) * 128

    x2 = x.reshape(N, HW, C)                     # free metadata reshape in HBM
    g2 = gamma.reshape(1, C).astype(jnp.float32)
    b2 = beta.reshape(1, C).astype(jnp.float32)
    if Cp != C:
        x2 = jnp.pad(x2, ((0, 0), (0, 0), (0, Cp - C)))
        g2 = jnp.pad(g2, ((0, 0), (0, Cp - C)))
        b2 = jnp.pad(b2, ((0, 0), (0, Cp - C)))

    c_inv = 1.0 / C
    row_chunk = _pick_row_chunk(HW, Cp, itemsize)
    bn = None if force_two_phase else _pick_bn(N, HW, Cp, itemsize, row_chunk, budget)

    if bn is not None:
        kernel = functools.partial(_grn_single_pass_kernel,
                                   row_chunk=row_chunk, c_inv=c_inv)
        out2 = pl.pallas_call(
            kernel,
            out_shape=jax.ShapeDtypeStruct((N, HW, Cp), x.dtype),
            grid=(N // bn,),
            in_specs=[
                pl.BlockSpec((bn, HW, Cp), lambda i: (i, 0, 0)),
                pl.BlockSpec((1, Cp), lambda i: (0, 0)),
                pl.BlockSpec((1, Cp), lambda i: (0, 0)),
            ],
            out_specs=pl.BlockSpec((bn, HW, Cp), lambda i: (i, 0, 0)),
            compiler_params=pltpu.CompilerParams(
                dimension_semantics=("parallel",),
                vmem_limit_bytes=vmem_limit,
            ),
        )(x2, g2, b2)
    else:
        if hw_tile is not None:
            gran = _sublane_granularity(itemsize)
            if HW % hw_tile or (hw_tile != HW and hw_tile % gran):
                raise ValueError(
                    f"invalid hw_tile={hw_tile} for HW={HW}, granularity {gran}")
            t = hw_tile
        else:
            t = _pick_hw_tile(HW, Cp, itemsize, budget)
        num_t = HW // t
        kernel = functools.partial(_grn_two_phase_kernel, c_inv=c_inv)
        out2 = pl.pallas_call(
            kernel,
            out_shape=jax.ShapeDtypeStruct((N, HW, Cp), x.dtype),
            grid=(N, 2, num_t),
            in_specs=[
                pl.BlockSpec((None, t, Cp), lambda n, p, h: (n, h, 0)),
                pl.BlockSpec((1, Cp), lambda n, p, h: (0, 0)),
                pl.BlockSpec((1, Cp), lambda n, p, h: (0, 0)),
            ],
            # GUARD: phase 0 pins the output block index at (n, 0, 0) so the
            # never-written output block is never flushed back to HBM; phase 1
            # then fully writes block (n, h) before eviction.  Do NOT reorder
            # the phase/hw grid axes or change this index_map without
            # rethinking that invariant.
            out_specs=pl.BlockSpec((None, t, Cp), lambda n, p, h: (n, h * p, 0)),
            scratch_shapes=[
                pltpu.VMEM((1, Cp), jnp.float32),   # per-channel sum of squares
                pltpu.VMEM((1, Cp), jnp.float32),   # fused per-channel scale
            ],
            compiler_params=pltpu.CompilerParams(
                dimension_semantics=("parallel", "arbitrary", "arbitrary"),
                vmem_limit_bytes=vmem_limit,
            ),
        )(x2, g2, b2)

    if Cp != C:
        out2 = out2[:, :, :C]
    return out2.reshape(N, H, W, C)


def grn_reference(x, gamma, beta):
    xf = x.astype(jnp.float32)
    gx = jnp.sqrt(jnp.sum(xf * xf, axis=(1, 2), keepdims=True))       # (N,1,1,C)
    nx = gx / (jnp.mean(gx, axis=-1, keepdims=True) + _EPS)           # (N,1,1,C)
    gf = gamma.astype(jnp.float32)
    bf = beta.astype(jnp.float32)
    return (gf * (xf * nx) + bf + xf).astype(x.dtype)


if __name__ == "__main__":
    key = jax.random.PRNGKey(0)
    kx, kg, kb, kx2, kg2, kb2, kx3 = jax.random.split(key, 7)

    # --- main shape: small but lane-dense (C multiple of 128) ---
    N, H, W, C = 2, 16, 16, 128
    x = jax.random.normal(kx, (N, H, W, C), dtype=jnp.float32)
    # nn.Parameter(torch.zeros(...)) in the module; small deterministic nonzero
    # values here so the normalization path is actually exercised.
    gamma = 0.1 * jax.random.normal(kg, (1, 1, 1, C), dtype=jnp.float32)
    beta = 0.1 * jax.random.normal(kb, (1, 1, 1, C), dtype=jnp.float32)
    ref = grn_reference(x, gamma, beta)

    # 1) Fast single-pass path (slab resident in VMEM, x read from HBM once).
    out_fast = jax.block_until_ready(grn_pallas(x, gamma, beta))
    assert out_fast.shape == (N, H, W, C)
    assert jnp.allclose(out_fast, ref, atol=1e-4, rtol=1e-4), \
        "single-pass mismatch vs reference"

    # 2) Two-phase HW-tiled path (large-shape / v7x-safe fallback), forced with
    #    a small tile so multiple HW tiles and both phases are covered.
    out_tiled = jax.block_until_ready(
        grn_pallas(x, gamma, beta, force_two_phase=True, hw_tile=64))
    assert jnp.allclose(out_tiled, ref, atol=1e-4, rtol=1e-4), \
        "two-phase mismatch vs reference"

    # 3) bf16 input: input-dtype epilogue (scale rounded to bf16) -> looser tol.
    xb = x.astype(jnp.bfloat16)
    ref_bf = grn_reference(xb, gamma, beta).astype(jnp.float32)
    out_bf = jax.block_until_ready(grn_pallas(xb, gamma, beta)).astype(jnp.float32)
    assert jnp.allclose(out_bf, ref_bf, atol=5e-2, rtol=5e-2), \
        "bf16 single-pass mismatch vs reference"
    out_bf2 = jax.block_until_ready(
        grn_pallas(xb, gamma, beta, force_two_phase=True, hw_tile=32)
    ).astype(jnp.float32)
    assert jnp.allclose(out_bf2, ref_bf, atol=5e-2, rtol=5e-2), \
        "bf16 two-phase mismatch vs reference"

    # 4) C not a multiple of 128 (exercises channel zero-padding + sum/real_C).
    C2 = 72
    x_c = jax.random.normal(kx2, (2, 8, 8, C2), dtype=jnp.float32)
    g_c = 0.1 * jax.random.normal(kg2, (1, 1, 1, C2), dtype=jnp.float32)
    b_c = 0.1 * jax.random.normal(kb2, (1, 1, 1, C2), dtype=jnp.float32)
    out_c = jax.block_until_ready(grn_pallas(x_c, g_c, b_c))
    assert jnp.allclose(out_c, grn_reference(x_c, g_c, b_c), atol=1e-4, rtol=1e-4), \
        "padded-C mismatch vs reference"

    # 5) Larger HW so the chunked (fori_loop) single-pass reduction is exercised.
    x_big = jax.random.normal(kx3, (1, 72, 72, 128), dtype=jnp.float32)
    out_big = jax.block_until_ready(grn_pallas(x_big, gamma, beta))
    assert jnp.allclose(out_big, grn_reference(x_big, gamma, beta),
                        atol=1e-4, rtol=1e-4), \
        "chunked-reduction mismatch vs reference"

    print("KERNEL_OK")
</pallas_src>

<mosaic_0001>
module attributes {stable_mosaic.version = 11 : i64} {
  func.func @_grn_single_pass_kernel(%arg0: i32, %arg1: memref<2x256x128xf32, #tpu.memory_space<vmem>>, %arg2: memref<1x128xf32, #tpu.memory_space<vmem>>, %arg3: memref<1x128xf32, #tpu.memory_space<vmem>>, %arg4: memref<2x256x128xf32, #tpu.memory_space<vmem>>) attributes {dimension_semantics = [#tpu.dimension_semantics<parallel>], iteration_bounds = array<i64: 1>, scalar_prefetch = 0 : i64, scratch_operands = 0 : i64, tpu.core_type = #tpu.core_type<tc>, window_params = [{transform_indices = @transform_0, window_bounds = array<i64: 2, 256, 128>}, {pipeline_mode = #tpu.pipeline_mode<synchronous>, transform_indices = @transform_1, window_bounds = array<i64: 1, 128>}, {pipeline_mode = #tpu.pipeline_mode<synchronous>, transform_indices = @transform_2, window_bounds = array<i64: 1, 128>}, {transform_indices = @transform_3, window_bounds = array<i64: 2, 256, 128>}]} {
    %c0 = arith.constant 0 : index
    %c0_0 = arith.constant 0 : index
    %c0_1 = arith.constant 0 : index
    %0 = vector.load %arg1[%c0, %c0_0, %c0_1] : memref<2x256x128xf32, #tpu.memory_space<vmem>>, vector<2x256x128xf32>
    %1 = arith.mulf %0, %0 : vector<2x256x128xf32>
    %cst = arith.constant dense<0.000000e+00> : vector<2x128xf32>
    %2 = vector.multi_reduction <add>, %1, %cst [1] : vector<2x256x128xf32> to vector<2x128xf32>
    %3 = math.sqrt %2 : vector<2x128xf32>
    %cst_2 = arith.constant dense<0.000000e+00> : vector<2xf32>
    %4 = vector.multi_reduction <add>, %3, %cst_2 [1] : vector<2x128xf32> to vector<2xf32>
    %5 = vector.shape_cast %4 : vector<2xf32> to vector<2x1xf32>
    %cst_3 = arith.constant 7.812500e-03 : f32
    %6 = vector.broadcast %cst_3 : f32 to vector<2x1xf32>
    %7 = arith.mulf %5, %6 : vector<2x1xf32>
    %cst_4 = arith.constant 9.99999997E-7 : f32
    %8 = vector.broadcast %cst_4 : f32 to vector<2x1xf32>
    %9 = arith.addf %7, %8 : vector<2x1xf32>
    %10 = vector.broadcast %9 : vector<2x1xf32> to vector<2x128xf32>
    %11 = arith.divf %3, %10 : vector<2x128xf32>
    %c0_5 = arith.constant 0 : index
    %c0_6 = arith.constant 0 : index
    %12 = vector.load %arg2[%c0_5, %c0_6] : memref<1x128xf32, #tpu.memory_space<vmem>>, vector<1x128xf32>
    %13 = vector.broadcast %12 : vector<1x128xf32> to vector<2x128xf32>
    %14 = arith.mulf %13, %11 : vector<2x128xf32>
    %cst_7 = arith.constant 1.000000e+00 : f32
    %15 = vector.broadcast %cst_7 : f32 to vector<2x128xf32>
    %16 = arith.addf %14, %15 : vector<2x128xf32>
    %c0_8 = arith.constant 0 : index
    %c0_9 = arith.constant 0 : index
    %c0_10 = arith.constant 0 : index
    %17 = vector.load %arg1[%c0_8, %c0_9, %c0_10] : memref<2x256x128xf32, #tpu.memory_space<vmem>>, vector<2x256x128xf32>
    %18 = vector.shape_cast %16 : vector<2x128xf32> to vector<2x1x128xf32>
    %19 = vector.broadcast %18 : vector<2x1x128xf32> to vector<2x256x128xf32>
    %20 = arith.mulf %17, %19 : vector<2x256x128xf32>
    %c0_11 = arith.constant 0 : index
    %c0_12 = arith.constant 0 : index
    %21 = vector.load %arg3[%c0_11, %c0_12] : memref<1x128xf32, #tpu.memory_space<vmem>>, vector<1x128xf32>
    %22 = vector.shape_cast %21 : vector<1x128xf32> to vector<1x1x128xf32>
    %23 = vector.broadcast %22 : vector<1x1x128xf32> to vector<2x256x128xf32>
    %24 = arith.addf %20, %23 : vector<2x256x128xf32>
    %c0_13 = arith.constant 0 : index
    %c0_14 = arith.constant 0 : index
    %c0_15 = arith.constant 0 : index
    %25 = vector.load %arg4[%c0_13, %c0_14, %c0_15] : memref<2x256x128xf32, #tpu.memory_space<vmem>>, vector<2x256x128xf32>
    tpu.vector_store %arg4[%c0_13, %c0_14, %c0_15], %24 {strides = array<i32>} : memref<2x256x128xf32, #tpu.memory_space<vmem>>, vector<2x256x128xf32>,
    return
  }
  func.func @transform_0(%arg0: i32) -> (i32, i32, i32) {
    %c0_i32 = arith.constant 0 : i32
    %c0_i32_0 = arith.constant 0 : i32
    %c0_i32_1 = arith.constant 0 : i32
    return %arg0, %c0_i32, %c0_i32_0 : i32, i32, i32
  }
  func.func @transform_1(%arg0: i32) -> (i32, i32) {
    %c0_i32 = arith.constant 0 : i32
    %c0_i32_0 = arith.constant 0 : i32
    %c0_i32_1 = arith.constant 0 : i32
    return %c0_i32, %c0_i32_0 : i32, i32
  }
  func.func @transform_2(%arg0: i32) -> (i32, i32) {
    %c0_i32 = arith.constant 0 : i32
    %c0_i32_0 = arith.constant 0 : i32
    %c0_i32_1 = arith.constant 0 : i32
    return %c0_i32, %c0_i32_0 : i32, i32
  }
  func.func @transform_3(%arg0: i32) -> (i32, i32, i32) {
    %c0_i32 = arith.constant 0 : i32
    %c0_i32_0 = arith.constant 0 : i32
    %c0_i32_1 = arith.constant 0 : i32
    return %arg0, %c0_i32, %c0_i32_0 : i32, i32, i32
  }
}

</mosaic_0001>

<llo_original>
// kernel: grn_pallas.1
$region0: #{grn_pallas.1}
  #allocation0 [shape = 'u32[]', space=smem, size = 0x4, offset = 0x4, fixed_abs, tag = 'smem constant byte address 0x4 - core index']
  #allocation1 [shape = 'u32[144,128]{1,0:T(1,128)}', space=vmem, size = 0x12000, scoped, tag = 'internal scratch']
  %s0 = inlined_call_operand.hbm [shape: f32[2,256,128], index: 0, kind: input, shape index: {}]
  %s1 = inlined_call_operand.vmem [shape: f32[1,128], index: 1, kind: input, shape index: {}]
  %s2 = inlined_call_operand.vmem [shape: f32[1,128], index: 2, kind: input, shape index: {}]
  %s3 = inlined_call_operand.hbm [shape: f32[2,256,128], index: 3, kind: output, shape index: {}]
  %s4 = sld [smem:[#allocation0]]
  $region26: #{grn_pallas.1} parent=0
    _
  %s6 = ssub.s32 1, %s4
  %s7 = scalar_select 0, %s6, %s4
  $region1: #{grn_pallas.1} parent=0
    #allocation2 [shape = 'u8[262144]{0}', space=vmem, size = 0x40000, scoped, tag = 'input window, operand 0, single buffered']
    #allocation3 [shape = 's32[1]{0}', space=sflag, size = 0x4, scoped, tag = 'scoped memory for grn_pallas.1']
    #allocation4 [shape = 's32[1]{0}', space=sflag, size = 0x4, scoped, tag = 'scoped memory for grn_pallas.1']
    #allocation5 [shape = 'u8[262144]{0}', space=vmem, size = 0x40000, scoped, tag = 'output window, operand 0, single buffered']
    %8 = vsyncpa [#allocation3], 0
    %9 = vsyncpa [#allocation4], 0
    // Predicated region
    $region2: #{grn_pallas.1} parent=1 // pred_check
      _
    $region3: #{grn_pallas.1} parent=1 // pred_check_branch
      %11 = sbr.rel (0) target = $region5
    $region4: #{grn_pallas.1} parent=1 // pred_region
      %s13 = ssub.s32 8192, 8192
      %14 = vsyncadd [#allocation3], %s13
      %s15 = sshll.u32 [#allocation2], 4
      %s16 = int_to_ptr.vmem [resolvable:$true] %s15
      %21 = dma.hbm_to_vmem [thread:$0]  %s0, 8192, %s16, [#allocation3], 128, 128, 8
    $region5: #{grn_pallas.1} parent=1 // pred_fallthru
      _
    // Predicated region
    $region6: #{grn_pallas.1} parent=1 // pred_check
      _
    $region7: #{grn_pallas.1} parent=1 // pred_check_branch
      %23 = sbr.rel (0) target = $region9
    $region8: #{grn_pallas.1} parent=1 // pred_region
      _
    $region9: #{grn_pallas.1} parent=1 // pred_fallthru
      _
    // Predicated region
    $region10: #{grn_pallas.1} parent=1 // pred_check
      _
    $region11: #{grn_pallas.1} parent=1 // pred_check_branch
      %25 = sbr.rel (0) target = $region13
    $region12: #{grn_pallas.1} parent=1 // pred_region
      _
    $region13: #{grn_pallas.1} parent=1 // pred_fallthru
      _
    // Predicated region
    $region14: #{grn_pallas.1} parent=1 // pred_check
      _
    $region15: #{grn_pallas.1} parent=1 // pred_check_branch
      %27 = sbr.rel (0) target = $region17
    $region16: #{grn_pallas.1} parent=1 // pred_region
      %28 = dma.done [#allocation3], 8192
    $region17: #{grn_pallas.1} parent=1 // pred_fallthru
      _
    %v29 = vld [vmem:[#allocation2] sm:$0xff]
    %v30 = vld [vmem:[#allocation2 + $0x8] sm:$0xff]
    %v31 = vld [vmem:[#allocation2 + $0x10] sm:$0xff]
    %v32 = vld [vmem:[#allocation2 + $0x18] sm:$0xff]
    %v33 = vld [vmem:[#allocation2 + $0x20] sm:$0xff]
    %v34 = vld [vmem:[#allocation2 + $0x28] sm:$0xff]
    %v35 = vld [vmem:[#allocation2 + $0x30] sm:$0xff]
    %v36 = vld [vmem:[#allocation2 + $0x38] sm:$0xff]
    %v37 = vld [vmem:[#allocation2 + $0x40] sm:$0xff]
    %v38 = vld [vmem:[#allocation2 + $0x48] sm:$0xff]
    %v39 = vld [vmem:[#allocation2 + $0x50] sm:$0xff]
    %v40 = vld [vmem:[#allocation2 + $0x58] sm:$0xff]
    %v41 = vld [vmem:[#allocation2 + $0x60] sm:$0xff]
    %v42 = vld [vmem:[#allocation2 + $0x68] sm:$0xff]
    %v43 = vld [vmem:[#allocation2 + $0x70] sm:$0xff]
    %v44 = vld [vmem:[#allocation2 + $0x78] sm:$0xff]
    %v45 = vld [vmem:[#allocation2 + $0x80] sm:$0xff]
    %v46 = vld [vmem:[#allocation2 + $0x88] sm:$0xff]
    %v47 = vld [vmem:[#allocation2 + $0x90] sm:$0xff]
    %v48 = vld [vmem:[#allocation2 + $0x98] sm:$0xff]
    %v49 = vld [vmem:[#allocation2 + $0xa0] sm:$0xff]
    %v50 = vld [vmem:[#allocation2 + $0xa8] sm:$0xff]
    %v51 = vld [vmem:[#allocation2 + $0xb0] sm:$0xff]
    %v52 = vld [vmem:[#allocation2 + $0xb8] sm:$0xff]
    %v53 = vld [vmem:[#allocation2 + $0xc0] sm:$0xff]
    %v54 = vld [vmem:[#allocation2 + $0xc8] sm:$0xff]
    %v55 = vld [vmem:[#allocation2 + $0xd0] sm:$0xff]
    %v56 = vld [vmem:[#allocation2 + $0xd8] sm:$0xff]
    %v57 = vld [vmem:[#allocation2 + $0xe0] sm:$0xff]
    %v58 = vld [vmem:[#allocation2 + $0xe8] sm:$0xff]
    %v59 = vld [vmem:[#allocation2 + $0xf0] sm:$0xff]
    %v60 = vld [vmem:[#allocation2 + $0xf8] sm:$0xff]
    %v61 = vld [vmem:[#allocation2 + $0x100] sm:$0xff]
    %v62 = vld [vmem:[#allocation2 + $0x108] sm:$0xff]
    %v63 = vld [vmem:[#allocation2 + $0x110] sm:$0xff]
    %v64 = vld [vmem:[#allocation2 + $0x118] sm:$0xff]
    %v65 = vld [vmem:[#allocation2 + $0x120] sm:$0xff]
    %v66 = vld [vmem:[#allocation2 + $0x128] sm:$0xff]
    %v67 = vld [vmem:[#allocation2 + $0x130] sm:$0xff]
    %v68 = vld [vmem:[#allocation2 + $0x138] sm:$0xff]
    %v69 = vld [vmem:[#allocation2 + $0x140] sm:$0xff]
    %v70 = vld [vmem:[#allocation2 + $0x148] sm:$0xff]
    %v71 = vld [vmem:[#allocation2 + $0x150] sm:$0xff]
    %v72 = vld [vmem:[#allocation2 + $0x158] sm:$0xff]
    %v73 = vld [vmem:[#allocation2 + $0x160] sm:$0xff]
    %v74 = vld [vmem:[#allocation2 + $0x168] sm:$0xff]
    %v75 = vld [vmem:[#allocation2 + $0x170] sm:$0xff]
    %v76 = vld [vmem:[#allocation2 + $0x178] sm:$0xff]
    %v77 = vld [vmem:[#allocation2 + $0x180] sm:$0xff]
    %v78 = vld [vmem:[#allocation2 + $0x188] sm:$0xff]
    %v79 = vld [vmem:[#allocation2 + $0x190] sm:$0xff]
    %v80 = vld [vmem:[#allocation2 + $0x198] sm:$0xff]
    %v81 = vld [vmem:[#allocation2 + $0x1a0] sm:$0xff]
    %v82 = vld [vmem:[#allocation2 + $0x1a8] sm:$0xff]
    %v83 = vld [vmem:[#allocation2 + $0x1b0] sm:$0xff]
    %v84 = vld [vmem:[#allocation2 + $0x1b8] sm:$0xff]
    %v85 = vld [vmem:[#allocation2 + $0x1c0] sm:$0xff]
    %v86 = vld [vmem:[#allocation2 + $0x1c8] sm:$0xff]
    %v87 = vld [vmem:[#allocation2 + $0x1d0] sm:$0xff]
    %v88 = vld [vmem:[#allocation2 + $0x1d8] sm:$0xff]
    %v89 = vld [vmem:[#allocation2 + $0x1e0] sm:$0xff]
    %v90 = vld [vmem:[#allocation2 + $0x1e8] sm:$0xff]
    %v91 = vld [vmem:[#allocation2 + $0x1f0] sm:$0xff]
    %v92 = vld [vmem:[#allocation2 + $0x1f8] sm:$0xff]
    %v93 = vmul.f32 %v29, %v29
    %v94 = vmul.f32 %v30, %v30
    %v95 = vmul.f32 %v31, %v31
    %v96 = vmul.f32 %v32, %v32
    %v97 = vmul.f32 %v33, %v33
    %v98 = vmul.f32 %v34, %v34
    %v99 = vmul.f32 %v35, %v35
    %v100 = vmul.f32 %v36, %v36
    %v101 = vmul.f32 %v37, %v37
    %v102 = vmul.f32 %v38, %v38
    %v103 = vmul.f32 %v39, %v39
    %v104 = vmul.f32 %v40, %v40
    %v105 = vmul.f32 %v41, %v41
    %v106 = vmul.f32 %v42, %v42
    %v107 = vmul.f32 %v43, %v43
    %v108 = vmul.f32 %v44, %v44
    %v109 = vmul.f32 %v45, %v45
    %v110 = vmul.f32 %v46, %v46
    %v111 = vmul.f32 %v47, %v47
    %v112 = vmul.f32 %v48, %v48
    %v113 = vmul.f32 %v49, %v49
    %v114 = vmul.f32 %v50, %v50
    %v115 = vmul.f32 %v51, %v51
    %v116 = vmul.f32 %v52, %v52
    %v117 = vmul.f32 %v53, %v53
    %v118 = vmul.f32 %v54, %v54
    %v119 = vmul.f32 %v55, %v55
    %v120 = vmul.f32 %v56, %v56
    %v121 = vmul.f32 %v57, %v57
    %v122 = vmul.f32 %v58, %v58
    %v123 = vmul.f32 %v59, %v59
    %v124 = vmul.f32 %v60, %v60
    %v125 = vmul.f32 %v61, %v61
    %v126 = vmul.f32 %v62, %v62
    %v127 = vmul.f32 %v63, %v63
    %v128 = vmul.f32 %v64, %v64
    %v129 = vmul.f32 %v65, %v65
    %v130 = vmul.f32 %v66, %v66
    %v131 = vmul.f32 %v67, %v67
    %v132 = vmul.f32 %v68, %v68
    %v133 = vmul.f32 %v69, %v69
    %v134 = vmul.f32 %v70, %v70
    %v135 = vmul.f32 %v71, %v71
    %v136 = vmul.f32 %v72, %v72
    %v137 = vmul.f32 %v73, %v73
    %v138 = vmul.f32 %v74, %v74
    %v139 = vmul.f32 %v75, %v75
    %v140 = vmul.f32 %v76, %v76
    %v141 = vmul.f32 %v77, %v77
    %v142 = vmul.f32 %v78, %v78
    %v143 = vmul.f32 %v79, %v79
    %v144 = vmul.f32 %v80, %v80
    %v145 = vmul.f32 %v81, %v81
    %v146 = vmul.f32 %v82, %v82
    %v147 = vmul.f32 %v83, %v83
    %v148 = vmul.f32 %v84, %v84
    %v149 = vmul.f32 %v85, %v85
    %v150 = vmul.f32 %v86, %v86
    %v151 = vmul.f32 %v87, %v87
    %v152 = vmul.f32 %v88, %v88
    %v153 = vmul.f32 %v89, %v89
    %v154 = vmul.f32 %v90, %v90
    %v155 = vmul.f32 %v91, %v91
    %v156 = vmul.f32 %v92, %v92
    %v157 = vadd.f32 %v93, %v94
    %v158 = vadd.f32 %v157, %v95
    %v159 = vadd.f32 %v158, %v96
    %v160 = vadd.f32 %v159, %v97
    %v161 = vadd.f32 %v160, %v98
    %v162 = vadd.f32 %v161, %v99
    %v163 = vadd.f32 %v162, %v100
    %v164 = vadd.f32 %v163, %v101
    %v165 = vadd.f32 %v164, %v102
    %v166 = vadd.f32 %v165, %v103
    %v167 = vadd.f32 %v166, %v104
    %v168 = vadd.f32 %v167, %v105
    %v169 = vadd.f32 %v168, %v106
    %v170 = vadd.f32 %v169, %v107
    %v171 = vadd.f32 %v170, %v108
    %v172 = vadd.f32 %v171, %v109
    %v173 = vadd.f32 %v172, %v110
    %v174 = vadd.f32 %v173, %v111
    %v175 = vadd.f32 %v174, %v112
    %v176 = vadd.f32 %v175, %v113
    %v177 = vadd.f32 %v176, %v114
    %v178 = vadd.f32 %v177, %v115
    %v179 = vadd.f32 %v178, %v116
    %v180 = vadd.f32 %v179, %v117
    %v181 = vadd.f32 %v180, %v118
    %v182 = vadd.f32 %v181, %v119
    %v183 = vadd.f32 %v182, %v120
    %v184 = vadd.f32 %v183, %v121
    %v185 = vadd.f32 %v184, %v122
    %v186 = vadd.f32 %v185, %v123
    %v187 = vadd.f32 %v186, %v124
    %v188 = vrot.slane %v187, 4
    %v189 = vadd.f32 %v187, %v188
    %v190 = vrot.slane %v189, 2
    %v191 = vadd.f32 %v189, %v190
    %v192 = vrot.slane %v191, 1
    %v193 = vadd.f32 %v191, %v192
    %v194 = vadd.f32 %v125, %v126
    %v195 = vadd.f32 %v194, %v127
    %v196 = vadd.f32 %v195, %v128
    %v197 = vadd.f32 %v196, %v129
    %v198 = vadd.f32 %v197, %v130
    %v199 = vadd.f32 %v198, %v131
    %v200 = vadd.f32 %v199, %v132
    %v201 = vadd.f32 %v200, %v133
    %v202 = vadd.f32 %v201, %v134
    %v203 = vadd.f32 %v202, %v135
    %v204 = vadd.f32 %v203, %v136
    %v205 = vadd.f32 %v204, %v137
    %v206 = vadd.f32 %v205, %v138
    %v207 = vadd.f32 %v206, %v139
    %v208 = vadd.f32 %v207, %v140
    %v209 = vadd.f32 %v208, %v141
    %v210 = vadd.f32 %v209, %v142
    %v211 = vadd.f32 %v210, %v143
    %v212 = vadd.f32 %v211, %v144
    %v213 = vadd.f32 %v212, %v145
    %v214 = vadd.f32 %v213, %v146
    %v215 = vadd.f32 %v214, %v147
    %v216 = vadd.f32 %v215, %v148
    %v217 = vadd.f32 %v216, %v149
    %v218 = vadd.f32 %v217, %v150
    %v219 = vadd.f32 %v218, %v151
    %v220 = vadd.f32 %v219, %v152
    %v221 = vadd.f32 %v220, %v153
    %v222 = vadd.f32 %v221, %v154
    %v223 = vadd.f32 %v222, %v155
    %v224 = vadd.f32 %v223, %v156
    %v225 = vrot.slane %v224, 4
    %v226 = vadd.f32 %v224, %v225
    %v227 = vrot.slane %v226, 2
    %v228 = vadd.f32 %v226, %v227
    %v229 = vrot.slane %v228, 1
    %v230 = vadd.f32 %v228, %v229
    %v231 = vrsqrt.pop %v193
    %v232 = vmul.f32 %v193, %v231
    %vm233 = vcmp.eq.f32.partialorder %v193, inf
    %v234 = vsel %vm233, %v193, %v232
    %vm235 = vcmp.eq.f32.partialorder %v193, 0.0
    %v236 = vand.u32 %v193, 2147483648
    %v237 = vsel %vm235, %v236, %v234
    %v238 = vrsqrt.pop %v230
    %v239 = vmul.f32 %v230, %v238
    %vm240 = vcmp.eq.f32.partialorder %v230, inf
    %v241 = vsel %vm240, %v230, %v239
    %vm242 = vcmp.eq.f32.partialorder %v230, 0.0
    %v243 = vand.u32 %v230, 2147483648
    %v244 = vsel %vm242, %v243, %v241
    %vm247 = vcmask 1041409
    %v248 = vsel %vm247, %v244, %v237
    %vm250 = vcmask 1041408
    %v251 = vsel %vm250, %v248, 0.0
    %252 = vadd.xlane.f32.xlu0 %v251
    %v253 = vpop.xlane.xlu0 %252
    %v254 = vmul.f32 %v253, 0.0078125
    %v255 = vadd.f32 %v254, 1e-06
    %v257 = vrot.slane %v255, 1
    %v260 = vrcp.pop %v255
    %v261 = vmul.f32 %v237, %v260
    %v262 = vrcp.pop %v257
    %v263 = vmul.f32 %v244, %v262
    %v264 = vld [vmem:[%s1] sm:$0x1]
    %v266 = vlaneseq
    %v267 = vshrl.u32 %v266, 7
    %v268 = vsub.s32 0, %v267
    %v269 = vrot.slane %v264, %v268
    %v273 = vrot.slane %v263, 7
    %v274 = vsel %vm247, %v273, %v261
    %v276 = vmul.f32 %v269, %v274
    %v277 = vadd.f32 %v276, 1.0
    %v280 = vunpack.c.l.s4 1966171168
    %v281 = vunpack.c.0.s8 %v280
    %v282 = vlaneseq
    %v283 = vshrl.u32 %v282, 7
    %v284 = vsub.s32 %v281, %v283
    %v285 = vrot.slane %v277, %v284
    %v286 = vcombine.high %v285, %v285
    %v288 = vunpack.c.l.s4 1966171168
    %v289 = vunpack.c.0.s8 %v288
    %v290 = vlaneseq
    %v291 = vshrl.u32 %v290, 7
    %v292 = vsub.s32 %v289, %v291
    %v293 = vrot.slane %v285, %v292
    %v295 = vunpack.c.l.s4 1966171168
    %v296 = vunpack.c.0.s8 %v295
    %v297 = vlaneseq
    %v298 = vshrl.u32 %v297, 7
    %v299 = vsub.s32 %v296, %v298
    %v300 = vrot.slane %v286, %v299
    %v301 = vlaneseq
    %v302 = vshrl.u32 %v301, 7
    %v303 = vsub.s32 0, %v302
    %v304 = vrot.slane %v293, %v303
    %v305 = vlaneseq
    %v306 = vshrl.u32 %v305, 7
    %v307 = vsub.s32 0, %v306
    %v308 = vrot.slane %v300, %v307
    %v311 = vmul.f32 %v29, %v304
    %v312 = vmul.f32 %v30, %v304
    %v313 = vmul.f32 %v31, %v304
    %v314 = vmul.f32 %v32, %v304
    %v315 = vmul.f32 %v33, %v304
    %v316 = vmul.f32 %v34, %v304
    %v317 = vmul.f32 %v35, %v304
    %v318 = vmul.f32 %v36, %v304
    %v319 = vmul.f32 %v37, %v304
    %v320 = vmul.f32 %v38, %v304
    %v321 = vmul.f32 %v39, %v304
    %v322 = vmul.f32 %v40, %v304
    %v323 = vmul.f32 %v41, %v304
    %v324 = vmul.f32 %v42, %v304
    %v325 = vmul.f32 %v43, %v304
    %v326 = vmul.f32 %v44, %v304
    %v327 = vmul.f32 %v45, %v304
    %v328 = vmul.f32 %v46, %v304
    %v329 = vmul.f32 %v47, %v304
    %v330 = vmul.f32 %v48, %v304
    %v331 = vmul.f32 %v49, %v304
    %v332 = vmul.f32 %v50, %v304
    %v333 = vmul.f32 %v51, %v304
    %v334 = vmul.f32 %v52, %v304
    %v335 = vmul.f32 %v53, %v304
    %v336 = vmul.f32 %v54, %v304
    %v337 = vmul.f32 %v55, %v304
    %v338 = vmul.f32 %v56, %v304
    %v339 = vmul.f32 %v57, %v304
    %v340 = vmul.f32 %v58, %v304
    %v341 = vmul.f32 %v59, %v304
    %v342 = vmul.f32 %v60, %v304
    %v343 = vmul.f32 %v61, %v308
    %v344 = vmul.f32 %v62, %v308
    %v345 = vmul.f32 %v63, %v308
    %v346 = vmul.f32 %v64, %v308
    %v347 = vmul.f32 %v65, %v308
    %v348 = vmul.f32 %v66, %v308
    %v349 = vmul.f32 %v67, %v308
    %v350 = vmul.f32 %v68, %v308
    %v351 = vmul.f32 %v69, %v308
    %v352 = vmul.f32 %v70, %v308
    %v353 = vmul.f32 %v71, %v308
    %v354 = vmul.f32 %v72, %v308
    %v355 = vmul.f32 %v73, %v308
    %v356 = vmul.f32 %v74, %v308
    %v357 = vmul.f32 %v75, %v308
    %v358 = vmul.f32 %v76, %v308
    %v359 = vmul.f32 %v77, %v308
    %v360 = vmul.f32 %v78, %v308
    %v361 = vmul.f32 %v79, %v308
    %v362 = vmul.f32 %v80, %v308
    %v363 = vmul.f32 %v81, %v308
    %v364 = vmul.f32 %v82, %v308
    %v365 = vmul.f32 %v83, %v308
    %v366 = vmul.f32 %v84, %v308
    %v367 = vmul.f32 %v85, %v308
    %v368 = vmul.f32 %v86, %v308
    %v369 = vmul.f32 %v87, %v308
    %v370 = vmul.f32 %v88, %v308
    %v371 = vmul.f32 %v89, %v308
    %v372 = vmul.f32 %v90, %v308
    %v373 = vmul.f32 %v91, %v308
    %v374 = vmul.f32 %v92, %v308
    %v375 = vld [vmem:[%s2] sm:$0x1]
    %v377 = vlaneseq
    %v378 = vshrl.u32 %v377, 7
    %v379 = vsub.s32 0, %v378
    %v380 = vrot.slane %v375, %v379
    %v382 = vadd.f32 %v311, %v380
    %v383 = vadd.f32 %v312, %v380
    %v384 = vadd.f32 %v313, %v380
    %v385 = vadd.f32 %v314, %v380
    %v386 = vadd.f32 %v315, %v380
    %v387 = vadd.f32 %v316, %v380
    %v388 = vadd.f32 %v317, %v380
    %v389 = vadd.f32 %v318, %v380
    %v390 = vadd.f32 %v319, %v380
    %v391 = vadd.f32 %v320, %v380
    %v392 = vadd.f32 %v321, %v380
    %v393 = vadd.f32 %v322, %v380
    %v394 = vadd.f32 %v323, %v380
    %v395 = vadd.f32 %v324, %v380
    %v396 = vadd.f32 %v325, %v380
    %v397 = vadd.f32 %v326, %v380
    %v398 = vadd.f32 %v327, %v380
    %v399 = vadd.f32 %v328, %v380
    %v400 = vadd.f32 %v329, %v380
    %v401 = vadd.f32 %v330, %v380
    %v402 = vadd.f32 %v331, %v380
    %v403 = vadd.f32 %v332, %v380
    %v404 = vadd.f32 %v333, %v380
    %v405 = vadd.f32 %v334, %v380
    %v406 = vadd.f32 %v335, %v380
    %v407 = vadd.f32 %v336, %v380
    %v408 = vadd.f32 %v337, %v380
    %v409 = vadd.f32 %v338, %v380
    %v410 = vadd.f32 %v339, %v380
    %v411 = vadd.f32 %v340, %v380
    %v412 = vadd.f32 %v341, %v380
    %v413 = vadd.f32 %v342, %v380
    %v414 = vadd.f32 %v343, %v380
    %v415 = vadd.f32 %v344, %v380
    %v416 = vadd.f32 %v345, %v380
    %v417 = vadd.f32 %v346, %v380
    %v418 = vadd.f32 %v347, %v380
    %v419 = vadd.f32 %v348, %v380
    %v420 = vadd.f32 %v349, %v380
    %v421 = vadd.f32 %v350, %v380
    %v422 = vadd.f32 %v351, %v380
    %v423 = vadd.f32 %v352, %v380
    %v424 = vadd.f32 %v353, %v380
    %v425 = vadd.f32 %v354, %v380
    %v426 = vadd.f32 %v355, %v380
    %v427 = vadd.f32 %v356, %v380
    %v428 = vadd.f32 %v357, %v380
    %v429 = vadd.f32 %v358, %v380
    %v430 = vadd.f32 %v359, %v380
    %v431 = vadd.f32 %v360, %v380
    %v432 = vadd.f32 %v361, %v380
    %v433 = vadd.f32 %v362, %v380
    %v434 = vadd.f32 %v363, %v380
    %v435 = vadd.f32 %v364, %v380
    %v436 = vadd.f32 %v365, %v380
    %v437 = vadd.f32 %v366, %v380
    %v438 = vadd.f32 %v367, %v380
    %v439 = vadd.f32 %v368, %v380
    %v440 = vadd.f32 %v369, %v380
    %v441 = vadd.f32 %v370, %v380
    %v442 = vadd.f32 %v371, %v380
    %v443 = vadd.f32 %v372, %v380
    %v444 = vadd.f32 %v373, %v380
    %v445 = vadd.f32 %v374, %v380
    %446 = vst [vmem:[#allocation5] sm:$0xff] %v382
    %447 = vst [vmem:[#allocation5 + $0x8] sm:$0xff] %v383
    %448 = vst [vmem:[#allocation5 + $0x10] sm:$0xff] %v384
    %449 = vst [vmem:[#allocation5 + $0x18] sm:$0xff] %v385
    %450 = vst [vmem:[#allocation5 + $0x20] sm:$0xff] %v386
    %451 = vst [vmem:[#allocation5 + $0x28] sm:$0xff] %v387
    %452 = vst [vmem:[#allocation5 + $0x30] sm:$0xff] %v388
    %453 = vst [vmem:[#allocation5 + $0x38] sm:$0xff] %v389
    %454 = vst [vmem:[#allocation5 + $0x40] sm:$0xff] %v390
    %455 = vst [vmem:[#allocation5 + $0x48] sm:$0xff] %v391
    %456 = vst [vmem:[#allocation5 + $0x50] sm:$0xff] %v392
    %457 = vst [vmem:[#allocation5 + $0x58] sm:$0xff] %v393
    %458 = vst [vmem:[#allocation5 + $0x60] sm:$0xff] %v394
    %459 = vst [vmem:[#allocation5 + $0x68] sm:$0xff] %v395
    %460 = vst [vmem:[#allocation5 + $0x70] sm:$0xff] %v396
    %461 = vst [vmem:[#allocation5 + $0x78] sm:$0xff] %v397
    %462 = vst [vmem:[#allocation5 + $0x80] sm:$0xff] %v398
    %463 = vst [vmem:[#allocation5 + $0x88] sm:$0xff] %v399
    %464 = vst [vmem:[#allocation5 + $0x90] sm:$0xff] %v400
    %465 = vst [vmem:[#allocation5 + $0x98] sm:$0xff] %v401
    %466 = vst [vmem:[#allocation5 + $0xa0] sm:$0xff] %v402
    %467 = vst [vmem:[#allocation5 + $0xa8] sm:$0xff] %v403
    %468 = vst [vmem:[#allocation5 + $0xb0] sm:$0xff] %v404
    %469 = vst [vmem:[#allocation5 + $0xb8] sm:$0xff] %v405
    %470 = vst [vmem:[#allocation5 + $0xc0] sm:$0xff] %v406
    %471 = vst [vmem:[#allocation5 + $0xc8] sm:$0xff] %v407
    %472 = vst [vmem:[#allocation5 + $0xd0] sm:$0xff] %v408
    %473 = vst [vmem:[#allocation5 + $0xd8] sm:$0xff] %v409
    %474 = vst [vmem:[#allocation5 + $0xe0] sm:$0xff] %v410
    %475 = vst [vmem:[#allocation5 + $0xe8] sm:$0xff] %v411
    %476 = vst [vmem:[#allocation5 + $0xf0] sm:$0xff] %v412
    %477 = vst [vmem:[#allocation5 + $0xf8] sm:$0xff] %v413
    %478 = vst [vmem:[#allocation5 + $0x100] sm:$0xff] %v414
    %479 = vst [vmem:[#allocation5 + $0x108] sm:$0xff] %v415
    %480 = vst [vmem:[#allocation5 + $0x110] sm:$0xff] %v416
    %481 = vst [vmem:[#allocation5 + $0x118] sm:$0xff] %v417
    %482 = vst [vmem:[#allocation5 + $0x120] sm:$0xff] %v418
    %483 = vst [vmem:[#allocation5 + $0x128] sm:$0xff] %v419
    %484 = vst [vmem:[#allocation5 + $0x130] sm:$0xff] %v420
    %485 = vst [vmem:[#allocation5 + $0x138] sm:$0xff] %v421
    %486 = vst [vmem:[#allocation5 + $0x140] sm:$0xff] %v422
    %487 = vst [vmem:[#allocation5 + $0x148] sm:$0xff] %v423
    %488 = vst [vmem:[#allocation5 + $0x150] sm:$0xff] %v424
    %489 = vst [vmem:[#allocation5 + $0x158] sm:$0xff] %v425
    %490 = vst [vmem:[#allocation5 + $0x160] sm:$0xff] %v426
    %491 = vst [vmem:[#allocation5 + $0x168] sm:$0xff] %v427
    %492 = vst [vmem:[#allocation5 + $0x170] sm:$0xff] %v428
    %493 = vst [vmem:[#allocation5 + $0x178] sm:$0xff] %v429
    %494 = vst [vmem:[#allocation5 + $0x180] sm:$0xff] %v430
    %495 = vst [vmem:[#allocation5 + $0x188] sm:$0xff] %v431
    %496 = vst [vmem:[#allocation5 + $0x190] sm:$0xff] %v432
    %497 = vst [vmem:[#allocation5 + $0x198] sm:$0xff] %v433
    %498 = vst [vmem:[#allocation5 + $0x1a0] sm:$0xff] %v434
    %499 = vst [vmem:[#allocation5 + $0x1a8] sm:$0xff] %v435
    %500 = vst [vmem:[#allocation5 + $0x1b0] sm:$0xff] %v436
    %501 = vst [vmem:[#allocation5 + $0x1b8] sm:$0xff] %v437
    %502 = vst [vmem:[#allocation5 + $0x1c0] sm:$0xff] %v438
    %503 = vst [vmem:[#allocation5 + $0x1c8] sm:$0xff] %v439
    %504 = vst [vmem:[#allocation5 + $0x1d0] sm:$0xff] %v440
    %505 = vst [vmem:[#allocation5 + $0x1d8] sm:$0xff] %v441
    %506 = vst [vmem:[#allocation5 + $0x1e0] sm:$0xff] %v442
    %507 = vst [vmem:[#allocation5 + $0x1e8] sm:$0xff] %v443
    %508 = vst [vmem:[#allocation5 + $0x1f0] sm:$0xff] %v444
    %509 = vst [vmem:[#allocation5 + $0x1f8] sm:$0xff] %v445
    // Predicated region
    $region18: #{grn_pallas.1} parent=1 // pred_check
      _
    $region19: #{grn_pallas.1} parent=1 // pred_check_branch
      %511 = sbr.rel (0) target = $region21
    $region20: #{grn_pallas.1} parent=1 // pred_region
      %s513 = ssub.s32 8192, 8192
      %514 = vsyncadd [#allocation4], %s513
      %s515 = sshll.u32 [#allocation5], 4
      %s516 = int_to_ptr.vmem [resolvable:$true] %s515
      %521 = dma.vmem_to_hbm [thread:$0]  %s516, 8192, %s3, [#allocation4], 128, 128, 8
    $region21: #{grn_pallas.1} parent=1 // pred_fallthru
      _
    // Predicated region
    $region22: #{grn_pallas.1} parent=1 // pred_check
      _
    $region23: #{grn_pallas.1} parent=1 // pred_check_branch
      %523 = sbr.rel (0) target = $region25
    $region24: #{grn_pallas.1} parent=1 // pred_region
      %524 = dma.done [#allocation4], 8192
    $region25: #{grn_pallas.1} parent=1 // pred_fallthru
      _
    %525 = vsyncpa [#allocation3], 1
    %526 = vsyncpa [#allocation4], 1

</llo_original>
